<compile_context>
chip_gen: v6e
topology: v6e:2x2x1
jax: 0.10.0
libtpu: 0.0.40
codegen_flags: <defaults>
</compile_context>

<pallas_src>
import functools

import jax
import jax.numpy as jnp
from jax import lax
from jax.experimental import pallas as pl
from jax.experimental.pallas import tpu as pltpu

MIN_VAL = 1e-6


def _damsm_sent_kernel(txt_ref, img_ref, out_ref, *, gamma3):
    """Gb independent (txt, img) pairs per grid step.

    txt_ref / img_ref : (Gb, B, D) VMEM tiles
    out_ref           : (Gb, B) loss block
    """
    txt = txt_ref[...].astype(jnp.float32)
    img = img_ref[...].astype(jnp.float32)

    # F.normalize(x, dim=-1, eps) == x / max(||x||_2, eps).
    txt_n = txt / jnp.maximum(
        jnp.sqrt(jnp.sum(txt * txt, axis=-1, keepdims=True)), MIN_VAL)
    img_n = img / jnp.maximum(
        jnp.sqrt(jnp.sum(img * img, axis=-1, keepdims=True)), MIN_VAL)

    # scores[g, i, j] = <img_n[g, i], txt_n[g, j]>   (batched over g, contract D).
    # precision=HIGHEST: multi-pass f32 MXU matmul -- the MXU is nowhere near
    # the bottleneck at these shapes and this removes the ~1e-3 bf16-pass error.
    scores = lax.dot_general(
        img_n, txt_n,
        dimension_numbers=(((2,), (2,)), ((0,), (0,))),
        preferred_element_type=jnp.float32,
        precision=lax.Precision.HIGHEST)                       # (Gb, B, B)

    # Exact pre-exp diagonal straight from the normalized vectors (VPU only).
    diag = jnp.sum(img_n * txt_n, axis=-1)                     # (Gb, B)

    e = jnp.exp(gamma3 * scores)                               # only B^2 exps / pair
    colsum = jnp.sum(e, axis=1)                                # (Gb, B): sum_i e[g,i,j]
    rowsum = jnp.sum(e, axis=2)                                # (Gb, B): sum_j e[g,i,j]

    # -log(diag_e/(colsum+eps)) - log(diag_e/(rowsum+eps))
    #   = log(colsum+eps) + log(rowsum+eps) - 2*gamma3*diag
    out_ref[...] = (jnp.log(colsum + MIN_VAL) + jnp.log(rowsum + MIN_VAL)
                    - (2.0 * gamma3) * diag)


def _choose_pairs_per_step(G, B, D, in_itemsize):
    """Largest divisor of G whose per-step footprint fits the VMEM budget,
    preferring to leave >= 2 grid steps so both v7x TensorCores get work."""
    budget = 24 << 20  # conservative: under v7x's 32 MiB scoped / 64 MiB physical

    def fits(gb):
        io = 2 * 2 * gb * B * D * in_itemsize              # 2 inputs, double-buffered
        tmp = gb * (3 * B * D + 3 * B * B + 8 * B) * 4     # f32 in-step temporaries
        out = 2 * gb * B * 4
        return io + tmp + out <= budget

    fitting = [g for g in range(1, G + 1) if G % g == 0 and fits(g)] or [1]
    two_step = [g for g in fitting if G // g >= 2]
    return max(two_step) if two_step else max(fitting)


def damsm_sent_loss(txt, img, *, margin=0.2, gamma3=10.0):
    """DAMSM sentence loss.

    txt, img: [B, D] (single pair -> returns [B], matching the PyTorch module)
              or [G, B, D] (G independent pairs batched into one pallas_call -> [G, B]).
    NOTE: `margin` is unused in the reference forward pass (kept for API parity).
    """
    del margin
    single = (txt.ndim == 2)
    if single:
        txt = txt[None]
        img = img[None]
    G, B, D = txt.shape

    gb = _choose_pairs_per_step(G, B, D, txt.dtype.itemsize)
    n_steps = G // gb

    kernel = functools.partial(_damsm_sent_kernel, gamma3=float(gamma3))
    out = pl.pallas_call(
        kernel,
        out_shape=jax.ShapeDtypeStruct((n_steps, gb, B), jnp.float32),
        grid=(n_steps,),
        in_specs=[
            pl.BlockSpec((gb, B, D), lambda s: (s, 0, 0)),
            pl.BlockSpec((gb, B, D), lambda s: (s, 0, 0)),
        ],
        out_specs=pl.BlockSpec((None, gb, B), lambda s: (s, 0, 0)),
        compiler_params=pltpu.CompilerParams(
            dimension_semantics=("parallel",),
            vmem_limit_bytes=48 << 20),  # v5e scoped default is only 16 MiB
    )(txt, img)
    out = out.reshape(G, B)
    return out[0] if single else out


def _reference(txt, img, gamma3=10.0):
    """Pure-JAX mirror of the PyTorch forward pass (f32, HIGHEST matmul)."""
    txt = txt.astype(jnp.float32)
    img = img.astype(jnp.float32)
    tn = txt / jnp.maximum(jnp.linalg.norm(txt, axis=-1, keepdims=True), MIN_VAL)
    im = img / jnp.maximum(jnp.linalg.norm(img, axis=-1, keepdims=True), MIN_VAL)
    scores = jnp.exp(gamma3 * jnp.dot(im, tn.T, precision=lax.Precision.HIGHEST))
    diag = jnp.diagonal(scores)
    loss_txt = -jnp.log(diag / (scores.sum(axis=0) + MIN_VAL))
    loss_img = -jnp.log(diag / (scores.sum(axis=1) + MIN_VAL))
    return loss_txt + loss_img


if __name__ == "__main__":
    key = jax.random.PRNGKey(0)
    k1, k2 = jax.random.split(key)
    B, D = 8, 32
    txt = jax.random.normal(k1, (B, D), dtype=jnp.float32)
    img = jax.random.normal(k2, (B, D), dtype=jnp.float32)

    # Single-pair path (matches the PyTorch module signature).
    loss = jax.block_until_ready(damsm_sent_loss(txt, img, margin=0.2, gamma3=10.0))
    ref = _reference(txt, img, gamma3=10.0)
    assert loss.shape == (B,)
    assert jnp.allclose(loss, ref, rtol=1e-4, atol=1e-4), (loss, ref)

    # Batched path: G independent (txt, img) pairs amortized over one pallas_call
    # (Gb pairs per grid step, >= 2 steps kept for v7x's two TensorCores).
    G = 4
    kt, ki = jax.random.split(jax.random.PRNGKey(1))
    txt_b = jax.random.normal(kt, (G, B, D), dtype=jnp.float32)
    img_b = jax.random.normal(ki, (G, B, D), dtype=jnp.float32)
    loss_b = jax.block_until_ready(damsm_sent_loss(txt_b, img_b, gamma3=10.0))
    ref_b = jnp.stack([_reference(txt_b[g], img_b[g], gamma3=10.0) for g in range(G)])
    assert loss_b.shape == (G, B)
    assert jnp.allclose(loss_b, ref_b, rtol=1e-4, atol=1e-4), (loss_b, ref_b)

    print("KERNEL_OK")
</pallas_src>

<mosaic_0001>
module attributes {stable_mosaic.version = 11 : i64} {
  func.func @_damsm_sent_kernel(%arg0: i32, %arg1: memref<1x8x32xf32, #tpu.memory_space<vmem>>, %arg2: memref<1x8x32xf32, #tpu.memory_space<vmem>>, %arg3: memref<1x1x8xf32, #tpu.memory_space<vmem>>) attributes {dimension_semantics = [#tpu.dimension_semantics<parallel>], iteration_bounds = array<i64: 1>, scalar_prefetch = 0 : i64, scratch_operands = 0 : i64, tpu.core_type = #tpu.core_type<tc>, window_params = [{transform_indices = @transform_0, window_bounds = array<i64: 1, 8, 32>}, {transform_indices = @transform_1, window_bounds = array<i64: 1, 8, 32>}, {transform_indices = @transform_2, window_bounds = array<i64: 1, 1, 8>}]} {
    %c0 = arith.constant 0 : index
    %c0_0 = arith.constant 0 : index
    %c0_1 = arith.constant 0 : index
    %0 = vector.load %arg1[%c0, %c0_0, %c0_1] : memref<1x8x32xf32, #tpu.memory_space<vmem>>, vector<1x8x32xf32>
    %c0_2 = arith.constant 0 : index
    %c0_3 = arith.constant 0 : index
    %c0_4 = arith.constant 0 : index
    %1 = vector.load %arg2[%c0_2, %c0_3, %c0_4] : memref<1x8x32xf32, #tpu.memory_space<vmem>>, vector<1x8x32xf32>
    %2 = arith.mulf %0, %0 : vector<1x8x32xf32>
    %cst = arith.constant dense<0.000000e+00> : vector<1x8xf32>
    %3 = vector.multi_reduction <add>, %2, %cst [2] : vector<1x8x32xf32> to vector<1x8xf32>
    %4 = vector.shape_cast %3 : vector<1x8xf32> to vector<1x8x1xf32>
    %5 = math.sqrt %4 : vector<1x8x1xf32>
    %cst_5 = arith.constant 9.99999997E-7 : f32
    %6 = vector.broadcast %cst_5 : f32 to vector<1x8x1xf32>
    %7 = arith.maximumf %5, %6 : vector<1x8x1xf32>
    %8 = vector.broadcast %7 : vector<1x8x1xf32> to vector<1x8x32xf32>
    %9 = arith.divf %0, %8 : vector<1x8x32xf32>
    %10 = arith.mulf %1, %1 : vector<1x8x32xf32>
    %cst_6 = arith.constant dense<0.000000e+00> : vector<1x8xf32>
    %11 = vector.multi_reduction <add>, %10, %cst_6 [2] : vector<1x8x32xf32> to vector<1x8xf32>
    %12 = vector.shape_cast %11 : vector<1x8xf32> to vector<1x8x1xf32>
    %13 = math.sqrt %12 : vector<1x8x1xf32>
    %cst_7 = arith.constant 9.99999997E-7 : f32
    %14 = vector.broadcast %cst_7 : f32 to vector<1x8x1xf32>
    %15 = arith.maximumf %13, %14 : vector<1x8x1xf32>
    %16 = vector.broadcast %15 : vector<1x8x1xf32> to vector<1x8x32xf32>
    %17 = arith.divf %1, %16 : vector<1x8x32xf32>
    %cst_8 = arith.constant dense<0.000000e+00> : vector<1x8x8xf32>
    %18 = tpu.matmul %17, %9, %cst_8 {dimension_numbers = #tpu.dot_dimension_numbers<[2], [2], [1], [1], [0, 0, 0, 1, 1, 1], [0], [0]>, precision = #tpu.contract_precision<fp32>} : vector<1x8x32xf32>, vector<1x8x32xf32>, vector<1x8x8xf32> -> vector<1x8x8xf32>
    %19 = arith.mulf %17, %9 : vector<1x8x32xf32>
    %cst_9 = arith.constant dense<0.000000e+00> : vector<1x8xf32>
    %20 = vector.multi_reduction <add>, %19, %cst_9 [2] : vector<1x8x32xf32> to vector<1x8xf32>
    %cst_10 = arith.constant 1.000000e+01 : f32
    %21 = vector.broadcast %cst_10 : f32 to vector<1x8x8xf32>
    %22 = arith.mulf %21, %18 : vector<1x8x8xf32>
    %23 = math.exp %22 : vector<1x8x8xf32>
    %cst_11 = arith.constant dense<0.000000e+00> : vector<1x8xf32>
    %24 = vector.multi_reduction <add>, %23, %cst_11 [1] : vector<1x8x8xf32> to vector<1x8xf32>
    %cst_12 = arith.constant dense<0.000000e+00> : vector<1x8xf32>
    %25 = vector.multi_reduction <add>, %23, %cst_12 [2] : vector<1x8x8xf32> to vector<1x8xf32>
    %cst_13 = arith.constant 9.99999997E-7 : f32
    %26 = vector.broadcast %cst_13 : f32 to vector<1x8xf32>
    %27 = arith.addf %24, %26 : vector<1x8xf32>
    %28 = math.log %27 : vector<1x8xf32>
    %cst_14 = arith.constant 9.99999997E-7 : f32
    %29 = vector.broadcast %cst_14 : f32 to vector<1x8xf32>
    %30 = arith.addf %25, %29 : vector<1x8xf32>
    %31 = math.log %30 : vector<1x8xf32>
    %32 = arith.addf %28, %31 : vector<1x8xf32>
    %cst_15 = arith.constant 2.000000e+01 : f32
    %33 = vector.broadcast %cst_15 : f32 to vector<1x8xf32>
    %34 = arith.mulf %33, %20 : vector<1x8xf32>
    %35 = arith.subf %32, %34 : vector<1x8xf32>
    %c0_16 = arith.constant 0 : index
    %c0_17 = arith.constant 0 : index
    %c0_18 = arith.constant 0 : index
    %36 = vector.load %arg3[%c0_16, %c0_17, %c0_18] : memref<1x1x8xf32, #tpu.memory_space<vmem>>, vector<1x1x8xf32>
    %37 = vector.shape_cast %36 : vector<1x1x8xf32> to vector<1x8xf32>
    %38 = vector.shape_cast %35 : vector<1x8xf32> to vector<1x1x8xf32>
    tpu.vector_store %arg3[%c0_16, %c0_17, %c0_18], %38 {strides = array<i32>} : memref<1x1x8xf32, #tpu.memory_space<vmem>>, vector<1x1x8xf32>,
    return
  }
  func.func @transform_0(%arg0: i32) -> (i32, i32, i32) {
    %c0_i32 = arith.constant 0 : i32
    %c0_i32_0 = arith.constant 0 : i32
    %c0_i32_1 = arith.constant 0 : i32
    return %arg0, %c0_i32, %c0_i32_0 : i32, i32, i32
  }
  func.func @transform_1(%arg0: i32) -> (i32, i32, i32) {
    %c0_i32 = arith.constant 0 : i32
    %c0_i32_0 = arith.constant 0 : i32
    %c0_i32_1 = arith.constant 0 : i32
    return %arg0, %c0_i32, %c0_i32_0 : i32, i32, i32
  }
  func.func @transform_2(%arg0: i32) -> (i32, i32, i32) {
    %c0_i32 = arith.constant 0 : i32
    %c0_i32_0 = arith.constant 0 : i32
    %c0_i32_1 = arith.constant 0 : i32
    return %arg0, %c0_i32, %c0_i32_0 : i32, i32, i32
  }
}

</mosaic_0001>

<llo_original>
// kernel: tpu_custom_call.1
$region0: #{tpu_custom_call.1}
  #allocation0 [shape = 'u32[]', space=smem, size = 0x4, offset = 0x4, fixed_abs, tag = 'smem constant byte address 0x4 - core index']
  #allocation1 [shape = 'u32[144,128]{1,0:T(1,128)}', space=vmem, size = 0x12000, scoped, tag = 'internal scratch']
  %s0 = inlined_call_operand.hbm [shape: f32[1,8,32], index: 0, kind: input, shape index: {}]
  %s1 = inlined_call_operand.hbm [shape: f32[1,8,32], index: 1, kind: input, shape index: {}]
  %s2 = inlined_call_operand.hbm [shape: f32[1,1,8], index: 2, kind: output, shape index: {}]
  %s3 = sld [smem:[#allocation0]]
  $region26: #{tpu_custom_call.1} parent=0
    _
  %s5 = ssub.s32 1, %s3
  %s6 = scalar_select 0, %s5, %s3
  $region1: #{tpu_custom_call.1} parent=0
    #allocation2 [shape = 'u8[4096]{0}', space=vmem, size = 0x1000, scoped, tag = 'input window, operand 0, single buffered']
    #allocation3 [shape = 's32[1]{0}', space=sflag, size = 0x4, scoped, tag = 'scoped memory for tpu_custom_call.1']
    #allocation4 [shape = 's32[1]{0}', space=sflag, size = 0x4, scoped, tag = 'scoped memory for tpu_custom_call.1']
    #allocation5 [shape = 'u8[4096]{0}', space=vmem, size = 0x1000, scoped, tag = 'input window, operand 1, single buffered']
    #allocation6 [shape = 's32[1]{0}', space=sflag, size = 0x4, scoped, tag = 'scoped memory for tpu_custom_call.1']
    #allocation7 [shape = 'u8[512]{0}', space=vmem, size = 0x400, scoped, tag = 'output window, operand 0, single buffered']
    %7 = vsyncpa [#allocation3], 0
    %8 = vsyncpa [#allocation6], 0
    %9 = vsyncpa [#allocation4], 0
    // Predicated region
    $region2: #{tpu_custom_call.1} parent=1 // pred_check
      _
    $region3: #{tpu_custom_call.1} parent=1 // pred_check_branch
      %11 = sbr.rel (0) target = $region5
    $region4: #{tpu_custom_call.1} parent=1 // pred_region
      %s13 = ssub.s32 128, 128
      %14 = vsyncadd [#allocation3], %s13
      %s16 = sshll.u32 [#allocation2], 4
      %s17 = int_to_ptr.vmem [resolvable:$true] %s16
      %19 = dma.hbm_to_vmem [thread:$0]  %s0, 128, %s17, [#allocation3]
    $region5: #{tpu_custom_call.1} parent=1 // pred_fallthru
      _
    // Predicated region
    $region6: #{tpu_custom_call.1} parent=1 // pred_check
      _
    $region7: #{tpu_custom_call.1} parent=1 // pred_check_branch
      %21 = sbr.rel (0) target = $region9
    $region8: #{tpu_custom_call.1} parent=1 // pred_region
      %s23 = ssub.s32 128, 128
      %24 = vsyncadd [#allocation6], %s23
      %s26 = sshll.u32 [#allocation5], 4
      %s27 = int_to_ptr.vmem [resolvable:$true] %s26
      %29 = dma.hbm_to_vmem [thread:$0]  %s1, 128, %s27, [#allocation6]
    $region9: #{tpu_custom_call.1} parent=1 // pred_fallthru
      _
    // Predicated region
    $region10: #{tpu_custom_call.1} parent=1 // pred_check
      _
    $region11: #{tpu_custom_call.1} parent=1 // pred_check_branch
      %31 = sbr.rel (0) target = $region13
    $region12: #{tpu_custom_call.1} parent=1 // pred_region
      %32 = dma.done [#allocation3], 128
    $region13: #{tpu_custom_call.1} parent=1 // pred_fallthru
      _
    // Predicated region
    $region14: #{tpu_custom_call.1} parent=1 // pred_check
      _
    $region15: #{tpu_custom_call.1} parent=1 // pred_check_branch
      %34 = sbr.rel (0) target = $region17
    $region16: #{tpu_custom_call.1} parent=1 // pred_region
      %35 = dma.done [#allocation6], 128
    $region17: #{tpu_custom_call.1} parent=1 // pred_fallthru
      _
    %v36 = vld [vmem:[#allocation2] sm:$0xff]
    %v37 = vld [vmem:[#allocation5] sm:$0xff]
    %v38 = vmul.f32 %v36, %v36
    %vm39 = vcmask 261120
    %v40 = vsel %vm39, %v38, 0.0
    %41 = vadd.xlane.f32.xlu0 %v40
    %v42 = vpop.xlane.xlu0 %41
    %v43 = vrsqrt.pop %v42
    %v44 = vmul.f32 %v42, %v43
    %vm45 = vcmp.eq.f32.partialorder %v42, inf
    %v46 = vsel %vm45, %v42, %v44
    %vm47 = vcmp.eq.f32.partialorder %v42, 0.0
    %v48 = vand.u32 %v42, 2147483648
    %v49 = vsel %vm47, %v48, %v46
    %v50 = vmax.f32 %v49, 1e-06
    %v51 = vrcp.pop %v50
    %v52 = vmul.f32 %v36, %v51
    %v53 = vmul.f32 %v37, %v37
    %v54 = vsel %vm39, %v53, 0.0
    %55 = vadd.xlane.f32.xlu0 %v54
    %v56 = vpop.xlane.xlu0 %55
    %v57 = vrsqrt.pop %v56
    %v58 = vmul.f32 %v56, %v57
    %vm59 = vcmp.eq.f32.partialorder %v56, inf
    %v60 = vsel %vm59, %v56, %v58
    %vm61 = vcmp.eq.f32.partialorder %v56, 0.0
    %v62 = vand.u32 %v56, 2147483648
    %v63 = vsel %vm61, %v62, %v60
    %v64 = vmax.f32 %v63, 1e-06
    %v65 = vrcp.pop %v64
    %v66 = vmul.f32 %v37, %v65
    %v68 = vsel %vm39, %v66, 0
    %v71 = vsel %vm39, %v52, 0
    %73 = vmatprep.subr.mxu0 0.0
    %74 = vmatpush1.xpose.msra.mxu0 0.0
    %75 = vmatprep.subr.mxu0 0.0
    %76 = vmatpush1.xpose.msra.mxu0 0.0
    %77 = vmatprep.subr.mxu0 0.0
    %78 = vmatpush1.xpose.msra.mxu0 0.0
    %79 = vmatprep.subr.mxu0 0.0
    %80 = vmatpush1.xpose.msra.mxu0 0.0
    %81 = vmatprep.subr.mxu0 0.0
    %82 = vmatpush1.xpose.msra.mxu0 0.0
    %83 = vmatprep.subr.mxu0 0.0
    %84 = vmatpush1.xpose.msra.mxu0 0.0
    %85 = vmatprep.subr.mxu0 0.0
    %86 = vmatpush1.xpose.msra.mxu0 0.0
    %87 = vmatprep.subr.mxu0 0.0
    %88 = vmatpush1.xpose.msra.mxu0 0.0
    %89 = vmatprep.subr.mxu0 0.0
    %90 = vmatpush1.xpose.msra.mxu0 0.0
    %91 = vmatprep.subr.mxu0 0.0
    %92 = vmatpush1.xpose.msra.mxu0 0.0
    %93 = vmatprep.subr.mxu0 0.0
    %94 = vmatpush1.xpose.msra.mxu0 0.0
    %95 = vmatprep.subr.mxu0 0.0
    %96 = vmatpush1.xpose.msra.mxu0 0.0
    %97 = vmatprep.subr.mxu0 0.0
    %98 = vmatpush1.xpose.msra.mxu0 0.0
    %99 = vmatprep.subr.mxu0 0.0
    %100 = vmatpush1.xpose.msra.mxu0 0.0
    %101 = vmatprep.subr.mxu0 0.0
    %102 = vmatpush1.xpose.msra.mxu0 0.0
    %103 = vmatprep.subr.mxu0 0.0
    %v104 = vand.u32 %v71, 4294901760
    %105 = vmatpush1.xpose.msra.mxu0 %v104
    %106 = vmatprep.subr.mxu0 0.0
    %107 = vmatpush2.xpose.msra.mxu0 0.0
    %108 = vmatprep.subr.mxu0 0.0
    %109 = vmatpush2.xpose.msra.mxu0 0.0
    %110 = vmatprep.subr.mxu0 0.0
    %111 = vmatpush2.xpose.msra.mxu0 0.0
    %112 = vmatprep.subr.mxu0 0.0
    %113 = vmatpush2.xpose.msra.mxu0 0.0
    %114 = vmatprep.subr.mxu0 0.0
    %115 = vmatpush2.xpose.msra.mxu0 0.0
    %116 = vmatprep.subr.mxu0 0.0
    %117 = vmatpush2.xpose.msra.mxu0 0.0
    %118 = vmatprep.subr.mxu0 0.0
    %119 = vmatpush2.xpose.msra.mxu0 0.0
    %120 = vmatprep.subr.mxu0 0.0
    %121 = vmatpush2.xpose.msra.mxu0 0.0
    %122 = vmatprep.subr.mxu0 0.0
    %123 = vmatpush2.xpose.msra.mxu0 0.0
    %124 = vmatprep.subr.mxu0 0.0
    %125 = vmatpush2.xpose.msra.mxu0 0.0
    %126 = vmatprep.subr.mxu0 0.0
    %127 = vmatpush2.xpose.msra.mxu0 0.0
    %128 = vmatprep.subr.mxu0 0.0
    %129 = vmatpush2.xpose.msra.mxu0 0.0
    %130 = vmatprep.subr.mxu0 0.0
    %131 = vmatpush2.xpose.msra.mxu0 0.0
    %132 = vmatprep.subr.mxu0 0.0
    %133 = vmatpush2.xpose.msra.mxu0 0.0
    %134 = vmatprep.subr.mxu0 0.0
    %135 = vmatpush2.xpose.msra.mxu0 0.0
    %136 = vmatprep.subr.mxu0 0.0
    %137 = vmatpush2.xpose.msra.mxu0 0.0
    %138 = vmatprep.mubr.f32.mxu0 0.0
    %v139 = vand.u32 %v68, 4294901760
    %v140 = vsub.f32 %v68, %v139
    %v141 = vand.u32 %v140, 4294901760
    %v142 = vsub.f32 %v140, %v141
    %v143 = vand.u32 %v142, 4294901760
    %144 = vmatmul.mubr.f32.gmra.mxu0 %v143
    %v145 = vpop.f32.mrf.mxu0
    %v146 = vadd.f32 0.0, %v145
    %v147 = vpop.f32.mrf.mxu0
    %148 = vdwg.mxu0
    %149 = vmatprep.subr.mxu0 0.0
    %150 = vmatpush1.xpose.msra.mxu0 0.0
    %151 = vmatprep.subr.mxu0 0.0
    %152 = vmatpush1.xpose.msra.mxu0 0.0
    %153 = vmatprep.subr.mxu0 0.0
    %154 = vmatpush1.xpose.msra.mxu0 0.0
    %155 = vmatprep.subr.mxu0 0.0
    %156 = vmatpush1.xpose.msra.mxu0 0.0
    %157 = vmatprep.subr.mxu0 0.0
    %158 = vmatpush1.xpose.msra.mxu0 0.0
    %159 = vmatprep.subr.mxu0 0.0
    %160 = vmatpush1.xpose.msra.mxu0 0.0
    %161 = vmatprep.subr.mxu0 0.0
    %162 = vmatpush1.xpose.msra.mxu0 0.0
    %163 = vmatprep.subr.mxu0 0.0
    %164 = vmatpush1.xpose.msra.mxu0 0.0
    %165 = vmatprep.subr.mxu0 0.0
    %166 = vmatpush1.xpose.msra.mxu0 0.0
    %167 = vmatprep.subr.mxu0 0.0
    %168 = vmatpush1.xpose.msra.mxu0 0.0
    %169 = vmatprep.subr.mxu0 0.0
    %170 = vmatpush1.xpose.msra.mxu0 0.0
    %171 = vmatprep.subr.mxu0 0.0
    %172 = vmatpush1.xpose.msra.mxu0 0.0
    %173 = vmatprep.subr.mxu0 0.0
    %174 = vmatpush1.xpose.msra.mxu0 0.0
    %175 = vmatprep.subr.mxu0 0.0
    %176 = vmatpush1.xpose.msra.mxu0 0.0
    %177 = vmatprep.subr.mxu0 0.0
    %178 = vmatpush1.xpose.msra.mxu0 0.0
    %179 = vmatprep.subr.mxu0 0.0
    %v180 = vand.u32 %v71, 4294901760
    %v181 = vsub.f32 %v71, %v180
    %v182 = vand.u32 %v181, 4294901760
    %v183 = vsub.f32 %v181, %v182
    %v184 = vand.u32 %v183, 4294901760
    %185 = vmatpush1.xpose.msra.mxu0 %v184
    %186 = vmatprep.subr.mxu0 0.0
    %187 = vmatpush2.xpose.msra.mxu0 0.0
    %188 = vmatprep.subr.mxu0 0.0
    %189 = vmatpush2.xpose.msra.mxu0 0.0
    %190 = vmatprep.subr.mxu0 0.0
    %191 = vmatpush2.xpose.msra.mxu0 0.0
    %192 = vmatprep.subr.mxu0 0.0
    %193 = vmatpush2.xpose.msra.mxu0 0.0
    %194 = vmatprep.subr.mxu0 0.0
    %195 = vmatpush2.xpose.msra.mxu0 0.0
    %196 = vmatprep.subr.mxu0 0.0
    %197 = vmatpush2.xpose.msra.mxu0 0.0
    %198 = vmatprep.subr.mxu0 0.0
    %199 = vmatpush2.xpose.msra.mxu0 0.0
    %200 = vmatprep.subr.mxu0 0.0
    %201 = vmatpush2.xpose.msra.mxu0 0.0
    %202 = vmatprep.subr.mxu0 0.0
    %203 = vmatpush2.xpose.msra.mxu0 0.0
    %204 = vmatprep.subr.mxu0 0.0
    %205 = vmatpush2.xpose.msra.mxu0 0.0
    %206 = vmatprep.subr.mxu0 0.0
    %207 = vmatpush2.xpose.msra.mxu0 0.0
    %208 = vmatprep.subr.mxu0 0.0
    %209 = vmatpush2.xpose.msra.mxu0 0.0
    %210 = vmatprep.subr.mxu0 0.0
    %211 = vmatpush2.xpose.msra.mxu0 0.0
    %212 = vmatprep.subr.mxu0 0.0
    %213 = vmatpush2.xpose.msra.mxu0 0.0
    %214 = vmatprep.subr.mxu0 0.0
    %215 = vmatpush2.xpose.msra.mxu0 0.0
    %216 = vmatprep.subr.mxu0 0.0
    %217 = vmatpush2.xpose.msra.mxu0 0.0
    %218 = vmatprep.mubr.f32.mxu0 0.0
    %v219 = vand.u32 %v68, 4294901760
    %220 = vmatmul.mubr.f32.gmra.mxu0 %v219
    %v221 = vpop.f32.mrf.mxu0
    %v222 = vadd.f32 %v146, %v221
    %v223 = vpop.f32.mrf.mxu0
    %224 = vdwg.mxu0
    %225 = vmatprep.subr.mxu0 0.0
    %226 = vmatpush1.xpose.msra.mxu0 0.0
    %227 = vmatprep.subr.mxu0 0.0
    %228 = vmatpush1.xpose.msra.mxu0 0.0
    %229 = vmatprep.subr.mxu0 0.0
    %230 = vmatpush1.xpose.msra.mxu0 0.0
    %231 = vmatprep.subr.mxu0 0.0
    %232 = vmatpush1.xpose.msra.mxu0 0.0
    %233 = vmatprep.subr.mxu0 0.0
    %234 = vmatpush1.xpose.msra.mxu0 0.0
    %235 = vmatprep.subr.mxu0 0.0
    %236 = vmatpush1.xpose.msra.mxu0 0.0
    %237 = vmatprep.subr.mxu0 0.0
    %238 = vmatpush1.xpose.msra.mxu0 0.0
    %239 = vmatprep.subr.mxu0 0.0
    %240 = vmatpush1.xpose.msra.mxu0 0.0
    %241 = vmatprep.subr.mxu0 0.0
    %242 = vmatpush1.xpose.msra.mxu0 0.0
    %243 = vmatprep.subr.mxu0 0.0
    %244 = vmatpush1.xpose.msra.mxu0 0.0
    %245 = vmatprep.subr.mxu0 0.0
    %246 = vmatpush1.xpose.msra.mxu0 0.0
    %247 = vmatprep.subr.mxu0 0.0
    %248 = vmatpush1.xpose.msra.mxu0 0.0
    %249 = vmatprep.subr.mxu0 0.0
    %250 = vmatpush1.xpose.msra.mxu0 0.0
    %251 = vmatprep.subr.mxu0 0.0
    %252 = vmatpush1.xpose.msra.mxu0 0.0
    %253 = vmatprep.subr.mxu0 0.0
    %254 = vmatpush1.xpose.msra.mxu0 0.0
    %255 = vmatprep.subr.mxu0 0.0
    %v256 = vand.u32 %v71, 4294901760
    %v257 = vsub.f32 %v71, %v256
    %258 = vmatpush1.xpose.msra.mxu0 %v257
    %259 = vmatprep.subr.mxu0 0.0
    %260 = vmatpush2.xpose.msra.mxu0 0.0
    %261 = vmatprep.subr.mxu0 0.0
    %262 = vmatpush2.xpose.msra.mxu0 0.0
    %263 = vmatprep.subr.mxu0 0.0
    %264 = vmatpush2.xpose.msra.mxu0 0.0
    %265 = vmatprep.subr.mxu0 0.0
    %266 = vmatpush2.xpose.msra.mxu0 0.0
    %267 = vmatprep.subr.mxu0 0.0
    %268 = vmatpush2.xpose.msra.mxu0 0.0
    %269 = vmatprep.subr.mxu0 0.0
    %270 = vmatpush2.xpose.msra.mxu0 0.0
    %271 = vmatprep.subr.mxu0 0.0
    %272 = vmatpush2.xpose.msra.mxu0 0.0
    %273 = vmatprep.subr.mxu0 0.0
    %274 = vmatpush2.xpose.msra.mxu0 0.0
    %275 = vmatprep.subr.mxu0 0.0
    %276 = vmatpush2.xpose.msra.mxu0 0.0
    %277 = vmatprep.subr.mxu0 0.0
    %278 = vmatpush2.xpose.msra.mxu0 0.0
    %279 = vmatprep.subr.mxu0 0.0
    %280 = vmatpush2.xpose.msra.mxu0 0.0
    %281 = vmatprep.subr.mxu0 0.0
    %282 = vmatpush2.xpose.msra.mxu0 0.0
    %283 = vmatprep.subr.mxu0 0.0
    %284 = vmatpush2.xpose.msra.mxu0 0.0
    %285 = vmatprep.subr.mxu0 0.0
    %286 = vmatpush2.xpose.msra.mxu0 0.0
    %287 = vmatprep.subr.mxu0 0.0
    %288 = vmatpush2.xpose.msra.mxu0 0.0
    %289 = vmatprep.subr.mxu0 0.0
    %290 = vmatpush2.xpose.msra.mxu0 0.0
    %291 = vmatprep.mubr.f32.mxu0 0.0
    %v292 = vand.u32 %v68, 4294901760
    %v293 = vsub.f32 %v68, %v292
    %294 = vmatmul.mubr.f32.gmra.mxu0 %v293
    %v295 = vpop.f32.mrf.mxu0
    %v296 = vadd.f32 %v222, %v295
    %v297 = vpop.f32.mrf.mxu0
    %298 = vdwg.mxu0
    %299 = vmatprep.subr.mxu0 0.0
    %300 = vmatpush1.xpose.msra.mxu0 0.0
    %301 = vmatprep.subr.mxu0 0.0
    %302 = vmatpush1.xpose.msra.mxu0 0.0
    %303 = vmatprep.subr.mxu0 0.0
    %304 = vmatpush1.xpose.msra.mxu0 0.0
    %305 = vmatprep.subr.mxu0 0.0
    %306 = vmatpush1.xpose.msra.mxu0 0.0
    %307 = vmatprep.subr.mxu0 0.0
    %308 = vmatpush1.xpose.msra.mxu0 0.0
    %309 = vmatprep.subr.mxu0 0.0
    %310 = vmatpush1.xpose.msra.mxu0 0.0
    %311 = vmatprep.subr.mxu0 0.0
    %312 = vmatpush1.xpose.msra.mxu0 0.0
    %313 = vmatprep.subr.mxu0 0.0
    %314 = vmatpush1.xpose.msra.mxu0 0.0
    %315 = vmatprep.subr.mxu0 0.0
    %316 = vmatpush1.xpose.msra.mxu0 0.0
    %317 = vmatprep.subr.mxu0 0.0
    %318 = vmatpush1.xpose.msra.mxu0 0.0
    %319 = vmatprep.subr.mxu0 0.0
    %320 = vmatpush1.xpose.msra.mxu0 0.0
    %321 = vmatprep.subr.mxu0 0.0
    %322 = vmatpush1.xpose.msra.mxu0 0.0
    %323 = vmatprep.subr.mxu0 0.0
    %324 = vmatpush1.xpose.msra.mxu0 0.0
    %325 = vmatprep.subr.mxu0 0.0
    %326 = vmatpush1.xpose.msra.mxu0 0.0
    %327 = vmatprep.subr.mxu0 0.0
    %328 = vmatpush1.xpose.msra.mxu0 0.0
    %329 = vmatprep.subr.mxu0 0.0
    %v330 = vand.u32 %v71, 4294901760
    %331 = vmatpush1.xpose.msra.mxu0 %v330
    %332 = vmatprep.subr.mxu0 0.0
    %333 = vmatpush2.xpose.msra.mxu0 0.0
    %334 = vmatprep.subr.mxu0 0.0
    %335 = vmatpush2.xpose.msra.mxu0 0.0
    %336 = vmatprep.subr.mxu0 0.0
    %337 = vmatpush2.xpose.msra.mxu0 0.0
    %338 = vmatprep.subr.mxu0 0.0
    %339 = vmatpush2.xpose.msra.mxu0 0.0
    %340 = vmatprep.subr.mxu0 0.0
    %341 = vmatpush2.xpose.msra.mxu0 0.0
    %342 = vmatprep.subr.mxu0 0.0
    %343 = vmatpush2.xpose.msra.mxu0 0.0
    %344 = vmatprep.subr.mxu0 0.0
    %345 = vmatpush2.xpose.msra.mxu0 0.0
    %346 = vmatprep.subr.mxu0 0.0
    %347 = vmatpush2.xpose.msra.mxu0 0.0
    %348 = vmatprep.subr.mxu0 0.0
    %349 = vmatpush2.xpose.msra.mxu0 0.0
    %350 = vmatprep.subr.mxu0 0.0
    %351 = vmatpush2.xpose.msra.mxu0 0.0
    %352 = vmatprep.subr.mxu0 0.0
    %353 = vmatpush2.xpose.msra.mxu0 0.0
    %354 = vmatprep.subr.mxu0 0.0
    %355 = vmatpush2.xpose.msra.mxu0 0.0
    %356 = vmatprep.subr.mxu0 0.0
    %357 = vmatpush2.xpose.msra.mxu0 0.0
    %358 = vmatprep.subr.mxu0 0.0
    %359 = vmatpush2.xpose.msra.mxu0 0.0
    %360 = vmatprep.subr.mxu0 0.0
    %361 = vmatpush2.xpose.msra.mxu0 0.0
    %362 = vmatprep.subr.mxu0 0.0
    %363 = vmatpush2.xpose.msra.mxu0 0.0
    %364 = vmatprep.mubr.f32.mxu0 0.0
    %v365 = vand.u32 %v68, 4294901760
    %v366 = vsub.f32 %v68, %v365
    %v367 = vand.u32 %v366, 4294901760
    %368 = vmatmul.mubr.f32.gmra.mxu0 %v367
    %v369 = vpop.f32.mrf.mxu0
    %v370 = vadd.f32 %v296, %v369
    %v371 = vpop.f32.mrf.mxu0
    %372 = vdwg.mxu0
    %373 = vmatprep.subr.mxu0 0.0
    %374 = vmatpush1.xpose.msra.mxu0 0.0
    %375 = vmatprep.subr.mxu0 0.0
    %376 = vmatpush1.xpose.msra.mxu0 0.0
    %377 = vmatprep.subr.mxu0 0.0
    %378 = vmatpush1.xpose.msra.mxu0 0.0
    %379 = vmatprep.subr.mxu0 0.0
    %380 = vmatpush1.xpose.msra.mxu0 0.0
    %381 = vmatprep.subr.mxu0 0.0
    %382 = vmatpush1.xpose.msra.mxu0 0.0
    %383 = vmatprep.subr.mxu0 0.0
    %384 = vmatpush1.xpose.msra.mxu0 0.0
    %385 = vmatprep.subr.mxu0 0.0
    %386 = vmatpush1.xpose.msra.mxu0 0.0
    %387 = vmatprep.subr.mxu0 0.0
    %388 = vmatpush1.xpose.msra.mxu0 0.0
    %389 = vmatprep.subr.mxu0 0.0
    %390 = vmatpush1.xpose.msra.mxu0 0.0
    %391 = vmatprep.subr.mxu0 0.0
    %392 = vmatpush1.xpose.msra.mxu0 0.0
    %393 = vmatprep.subr.mxu0 0.0
    %394 = vmatpush1.xpose.msra.mxu0 0.0
    %395 = vmatprep.subr.mxu0 0.0
    %396 = vmatpush1.xpose.msra.mxu0 0.0
    %397 = vmatprep.subr.mxu0 0.0
    %398 = vmatpush1.xpose.msra.mxu0 0.0
    %399 = vmatprep.subr.mxu0 0.0
    %400 = vmatpush1.xpose.msra.mxu0 0.0
    %401 = vmatprep.subr.mxu0 0.0
    %402 = vmatpush1.xpose.msra.mxu0 0.0
    %403 = vmatprep.subr.mxu0 0.0
    %v404 = vand.u32 %v71, 4294901760
    %v405 = vsub.f32 %v71, %v404
    %v406 = vand.u32 %v405, 4294901760
    %407 = vmatpush1.xpose.msra.mxu0 %v406
    %408 = vmatprep.subr.mxu0 0.0
    %409 = vmatpush2.xpose.msra.mxu0 0.0
    %410 = vmatprep.subr.mxu0 0.0
    %411 = vmatpush2.xpose.msra.mxu0 0.0
    %412 = vmatprep.subr.mxu0 0.0
    %413 = vmatpush2.xpose.msra.mxu0 0.0
    %414 = vmatprep.subr.mxu0 0.0
    %415 = vmatpush2.xpose.msra.mxu0 0.0
    %416 = vmatprep.subr.mxu0 0.0
    %417 = vmatpush2.xpose.msra.mxu0 0.0
    %418 = vmatprep.subr.mxu0 0.0
    %419 = vmatpush2.xpose.msra.mxu0 0.0
    %420 = vmatprep.subr.mxu0 0.0
    %421 = vmatpush2.xpose.msra.mxu0 0.0
    %422 = vmatprep.subr.mxu0 0.0
    %423 = vmatpush2.xpose.msra.mxu0 0.0
    %424 = vmatprep.subr.mxu0 0.0
    %425 = vmatpush2.xpose.msra.mxu0 0.0
    %426 = vmatprep.subr.mxu0 0.0
    %427 = vmatpush2.xpose.msra.mxu0 0.0
    %428 = vmatprep.subr.mxu0 0.0
    %429 = vmatpush2.xpose.msra.mxu0 0.0
    %430 = vmatprep.subr.mxu0 0.0
    %431 = vmatpush2.xpose.msra.mxu0 0.0
    %432 = vmatprep.subr.mxu0 0.0
    %433 = vmatpush2.xpose.msra.mxu0 0.0
    %434 = vmatprep.subr.mxu0 0.0
    %435 = vmatpush2.xpose.msra.mxu0 0.0
    %436 = vmatprep.subr.mxu0 0.0
    %437 = vmatpush2.xpose.msra.mxu0 0.0
    %438 = vmatprep.subr.mxu0 0.0
    %439 = vmatpush2.xpose.msra.mxu0 0.0
    %440 = vmatprep.mubr.f32.mxu0 0.0
    %v441 = vand.u32 %v68, 4294901760
    %442 = vmatmul.mubr.f32.gmra.mxu0 %v441
    %v443 = vpop.f32.mrf.mxu0
    %v444 = vadd.f32 %v370, %v443
    %v445 = vpop.f32.mrf.mxu0
    %446 = vdwg.mxu0
    %447 = vmatprep.subr.mxu0 0.0
    %448 = vmatpush1.xpose.msra.mxu0 0.0
    %449 = vmatprep.subr.mxu0 0.0
    %450 = vmatpush1.xpose.msra.mxu0 0.0
    %451 = vmatprep.subr.mxu0 0.0
    %452 = vmatpush1.xpose.msra.mxu0 0.0
    %453 = vmatprep.subr.mxu0 0.0
    %454 = vmatpush1.xpose.msra.mxu0 0.0
    %455 = vmatprep.subr.mxu0 0.0
    %456 = vmatpush1.xpose.msra.mxu0 0.0
    %457 = vmatprep.subr.mxu0 0.0
    %458 = vmatpush1.xpose.msra.mxu0 0.0
    %459 = vmatprep.subr.mxu0 0.0
    %460 = vmatpush1.xpose.msra.mxu0 0.0
    %461 = vmatprep.subr.mxu0 0.0
    %462 = vmatpush1.xpose.msra.mxu0 0.0
    %463 = vmatprep.subr.mxu0 0.0
    %464 = vmatpush1.xpose.msra.mxu0 0.0
    %465 = vmatprep.subr.mxu0 0.0
    %466 = vmatpush1.xpose.msra.mxu0 0.0
    %467 = vmatprep.subr.mxu0 0.0
    %468 = vmatpush1.xpose.msra.mxu0 0.0
    %469 = vmatprep.subr.mxu0 0.0
    %470 = vmatpush1.xpose.msra.mxu0 0.0
    %471 = vmatprep.subr.mxu0 0.0
    %472 = vmatpush1.xpose.msra.mxu0 0.0
    %473 = vmatprep.subr.mxu0 0.0
    %474 = vmatpush1.xpose.msra.mxu0 0.0
    %475 = vmatprep.subr.mxu0 0.0
    %476 = vmatpush1.xpose.msra.mxu0 0.0
    %477 = vmatprep.subr.mxu0 0.0
    %v478 = vand.u32 %v71, 4294901760
    %479 = vmatpush1.xpose.msra.mxu0 %v478
    %480 = vmatprep.subr.mxu0 0.0
    %481 = vmatpush2.xpose.msra.mxu0 0.0
    %482 = vmatprep.subr.mxu0 0.0
    %483 = vmatpush2.xpose.msra.mxu0 0.0
    %484 = vmatprep.subr.mxu0 0.0
    %485 = vmatpush2.xpose.msra.mxu0 0.0
    %486 = vmatprep.subr.mxu0 0.0
    %487 = vmatpush2.xpose.msra.mxu0 0.0
    %488 = vmatprep.subr.mxu0 0.0
    %489 = vmatpush2.xpose.msra.mxu0 0.0
    %490 = vmatprep.subr.mxu0 0.0
    %491 = vmatpush2.xpose.msra.mxu0 0.0
    %492 = vmatprep.subr.mxu0 0.0
    %493 = vmatpush2.xpose.msra.mxu0 0.0
    %494 = vmatprep.subr.mxu0 0.0
    %495 = vmatpush2.xpose.msra.mxu0 0.0
    %496 = vmatprep.subr.mxu0 0.0
    %497 = vmatpush2.xpose.msra.mxu0 0.0
    %498 = vmatprep.subr.mxu0 0.0
    %499 = vmatpush2.xpose.msra.mxu0 0.0
    %500 = vmatprep.subr.mxu0 0.0
    %501 = vmatpush2.xpose.msra.mxu0 0.0
    %502 = vmatprep.subr.mxu0 0.0
    %503 = vmatpush2.xpose.msra.mxu0 0.0
    %504 = vmatprep.subr.mxu0 0.0
    %505 = vmatpush2.xpose.msra.mxu0 0.0
    %506 = vmatprep.subr.mxu0 0.0
    %507 = vmatpush2.xpose.msra.mxu0 0.0
    %508 = vmatprep.subr.mxu0 0.0
    %509 = vmatpush2.xpose.msra.mxu0 0.0
    %510 = vmatprep.subr.mxu0 0.0
    %511 = vmatpush2.xpose.msra.mxu0 0.0
    %512 = vmatprep.mubr.f32.mxu0 0.0
    %v513 = vand.u32 %v68, 4294901760
    %514 = vmatmul.mubr.f32.gmra.mxu0 %v513
    %v515 = vpop.f32.mrf.mxu0
    %v516 = vadd.f32 %v444, %v515
    %v517 = vpop.f32.mrf.mxu0
    %518 = vdwg.mxu0
    %v519 = vmul.f32 %v66, %v52
    %v520 = vsel %vm39, %v519, 0.0
    %521 = vadd.xlane.f32.xlu0 %v520
    %v522 = vpop.xlane.xlu0 %521
    %v523 = vmul.f32 %v516, 10.0
    %v524 = vmul.f32 %v523, 1.442695
    %v525 = vpow.pop %v524
    %vm526 = vcmask 64512
    %v527 = vsel %vm526, %v525, 0.0
    %v528 = vrot.slane %v527, 4
    %v529 = vadd.f32 %v527, %v528
    %v530 = vrot.slane %v529, 2
    %v531 = vadd.f32 %v529, %v530
    %v532 = vrot.slane %v531, 1
    %v533 = vadd.f32 %v531, %v532
    %534 = vadd.xlane.f32.xlu0 %v527
    %v535 = vpop.xlane.xlu0 %534
    %v536 = vadd.f32 %v533, 1e-06
    %v537 = vlog2.pop %v536
    %v538 = vmul.f32 %v537, 0.6931472
    %v539 = vadd.f32 %v535, 1e-06
    %v540 = vlog2.pop %v539
    %v541 = vmul.f32 %v540, 0.6931472
    %v543 = vlaneseq
    %v544 = vand.u32 %v543, 127
    %v545 = vlaneseq
    %v546 = vshrl.u32 %v545, 7
    %v547 = vsub.s32 %v544, %v546
    %v548 = vrot.slane %v541, %v547
    %v550 = vadd.f32 %v538, %v548
    %v551 = vmul.f32 %v522, 20.0
    %v553 = vlaneseq
    %v554 = vshrl.u32 %v553, 7
    %v555 = vsub.s32 %v544, %v554
    %v556 = vrot.slane %v551, %v555
    %v558 = vsub.f32 %v550, %v556
    %vm559 = vcmask 57344
    %560 = vst.msk [vmem:[#allocation7] sm:$0x1] %vm559, %v558
    // Predicated region
    $region18: #{tpu_custom_call.1} parent=1 // pred_check
      _
    $region19: #{tpu_custom_call.1} parent=1 // pred_check_branch
      %562 = sbr.rel (0) target = $region21
    $region20: #{tpu_custom_call.1} parent=1 // pred_region
      %s564 = ssub.s32 16, 16
      %565 = vsyncadd [#allocation4], %s564
      %s567 = sshll.u32 [#allocation7], 4
      %s568 = int_to_ptr.vmem [resolvable:$true] %s567
      %570 = dma.vmem_to_hbm [thread:$0]  %s568, 16, %s2, [#allocation4]
    $region21: #{tpu_custom_call.1} parent=1 // pred_fallthru
      _
    // Predicated region
    $region22: #{tpu_custom_call.1} parent=1 // pred_check
      _
    $region23: #{tpu_custom_call.1} parent=1 // pred_check_branch
      %572 = sbr.rel (0) target = $region25
    $region24: #{tpu_custom_call.1} parent=1 // pred_region
      %573 = dma.done [#allocation4], 16
    $region25: #{tpu_custom_call.1} parent=1 // pred_fallthru
      _
    %574 = vsyncpa [#allocation3], 1
    %575 = vsyncpa [#allocation6], 1
    %576 = vsyncpa [#allocation4], 1

</llo_original>
